<compile_context>
chip_gen: v5e
topology: v5e:2x2
jax: 0.10.0
libtpu: 0.0.40
codegen_flags: <defaults>
</compile_context>

<pallas_src>
import math

import jax
import jax.numpy as jnp
from jax.experimental import pallas as pl
from jax.experimental.pallas import tpu as pltpu

_LANE = 128
_SUBLANE = 8


def _round_up(n, m):
    return ((n + m - 1) // m) * m


def _mdlstm_kernel(z_ref, w_ref, c0_ref, c1_ref, ct_ref, ht_ref):
    """One batch tile of the MD-LSTM cell.

    z_ref : (TB, in + 2*out + 1)   fused [x | h0 | h1 | 1]
    w_ref : (in + 2*out + 1, 5*out_pad) fused [w ; u0 ; u1 ; b], gate-padded
    c0_ref, c1_ref : (TB, out_pad) previous cell states (zero-padded lanes)
    ct_ref, ht_ref : (TB, out_pad) outputs (lane-dense stores)
    """
    out_pad = c0_ref.shape[1]

    # Single fused MXU matmul; bias is folded in via the ones column of z.
    gates = jnp.dot(z_ref[...], w_ref[...], preferred_element_type=jnp.float32)

    def sig(v):
        # sigmoid(x) == 0.5 * (1 + tanh(x/2)) : one EUP tanh, no exp+divide.
        return 0.5 * (jnp.tanh(0.5 * v) + 1.0)

    # Each gate sits in its own 128-lane-aligned tile of the gate slab.
    it = sig(gates[:, 0 * out_pad:1 * out_pad])
    ft = sig(gates[:, 1 * out_pad:2 * out_pad])
    gt = jnp.tanh(gates[:, 2 * out_pad:3 * out_pad])
    ot = sig(gates[:, 3 * out_pad:4 * out_pad])
    lt = sig(gates[:, 4 * out_pad:5 * out_pad])

    c0 = c0_ref[...].astype(jnp.float32)
    c1 = c1_ref[...].astype(jnp.float32)

    ct = ft * (lt * c0 + (1.0 - lt) * c1) + it * gt
    ht = ot * jnp.tanh(ct)

    ct_ref[...] = ct.astype(ct_ref.dtype)
    ht_ref[...] = ht.astype(ht_ref.dtype)


def mdlstm_cell_forward(x, c_prev_dim0, h_prev_dim0, c_prev_dim1, h_prev_dim1,
                        w, u0, u1, b, *, matmul_dtype=None, batch_tile=256):
    """Pallas implementation of MDLSTMCell.forward. Returns (ct, ht).

    x               : (B, in_channels)
    c/h_prev_dim0/1 : (B, out_channels)
    w               : (in_channels, 5*out_channels)
    u0, u1          : (out_channels, 5*out_channels)
    b               : (5*out_channels,)
    """
    batch, in_ch = x.shape
    out = c_prev_dim0.shape[1]
    dtype = x.dtype

    out_pad = _round_up(out, _LANE)          # each gate -> its own 128-lane tile
    n_pad = 5 * out_pad
    k_fused = in_ch + 2 * out + 1            # +1 row folds the bias in

    # ---- one-time operand prep (layout plumbing, plain XLA ops) -------------
    # Stack [w; u0; u1; b] -> (k, 5*out), then pad each gate's column block
    # from `out` to `out_pad` so in-kernel slices are 128-lane aligned.
    w_stack = jnp.concatenate(
        [w, u0, u1, b.reshape(1, 5 * out).astype(w.dtype)], axis=0)
    w_stack = w_stack.reshape(k_fused, 5, out)
    w_fused = jnp.zeros((k_fused, 5, out_pad), w.dtype)
    w_fused = w_fused.at[:, :, :out].set(w_stack).reshape(k_fused, n_pad)

    z = jnp.concatenate(
        [x,
         h_prev_dim0.astype(dtype),
         h_prev_dim1.astype(dtype),
         jnp.ones((batch, 1), dtype)], axis=1)                 # (B, k_fused)

    if matmul_dtype is not None:
        # bf16 MXU operands; accumulation stays f32 (preferred_element_type).
        z = z.astype(matmul_dtype)
        w_fused = w_fused.astype(matmul_dtype)

    # ---- batch tiling: grid over independent rows ---------------------------
    tb = min(batch_tile, _round_up(batch, _SUBLANE))
    b_pad = _round_up(batch, tb)
    grid = (b_pad // tb,)

    def pad_rows(a, cols):
        buf = jnp.zeros((b_pad, cols), a.dtype)
        return buf.at[:a.shape[0], :a.shape[1]].set(a)

    z_p = pad_rows(z, k_fused)
    c0_p = pad_rows(c_prev_dim0.astype(dtype), out_pad)
    c1_p = pad_rows(c_prev_dim1.astype(dtype), out_pad)

    grid_spec = pltpu.PrefetchScalarGridSpec(
        num_scalar_prefetch=0,
        grid=grid,
        in_specs=[
            pl.BlockSpec((tb, k_fused), lambda i: (i, 0)),       # z tile
            pl.BlockSpec((k_fused, n_pad), lambda i: (0, 0)),    # weights: resident
            pl.BlockSpec((tb, out_pad), lambda i: (i, 0)),       # c_prev_dim0
            pl.BlockSpec((tb, out_pad), lambda i: (i, 0)),       # c_prev_dim1
        ],
        out_specs=(
            pl.BlockSpec((tb, out_pad), lambda i: (i, 0)),
            pl.BlockSpec((tb, out_pad), lambda i: (i, 0)),
        ),
    )

    ct_p, ht_p = pl.pallas_call(
        _mdlstm_kernel,
        out_shape=(
            jax.ShapeDtypeStruct((b_pad, out_pad), dtype),
            jax.ShapeDtypeStruct((b_pad, out_pad), dtype),
        ),
        grid_spec=grid_spec,
        compiler_params=pltpu.CompilerParams(
            dimension_semantics=("parallel",),   # batch tiles are independent
        ),
    )(z_p, w_fused, c0_p, c1_p)

    # Strip batch / lane padding.
    return ct_p[:batch, :out], ht_p[:batch, :out]

# TODO(synk): the surrounding MD-LSTM scan (not part of this module) could be
# folded into one gridded pallas_call with h/c carried in VMEM scratch to
# amortize weight DMA across steps.


def _xavier_uniform(key, shape, dtype=jnp.float32):
    # Matches torch.nn.init.xavier_uniform_ for a 2-D weight (fan_in, fan_out).
    fan_in, fan_out = shape
    bound = math.sqrt(6.0 / (fan_in + fan_out))
    return jax.random.uniform(key, shape, dtype, minval=-bound, maxval=bound)


def _reference(x, c0, h0, c1, h1, w, u0, u1, b):
    gates = x @ w + h0 @ u0 + h1 @ u1 + b
    out = c0.shape[1]
    it, ft, gt, ot, lt = [gates[:, i * out:(i + 1) * out] for i in range(5)]
    it = jax.nn.sigmoid(it)
    ft = jax.nn.sigmoid(ft)
    gt = jnp.tanh(gt)
    ot = jax.nn.sigmoid(ot)
    lt = jax.nn.sigmoid(lt)
    ct = ft * (lt * c0 + (1.0 - lt) * c1) + it * gt
    ht = ot * jnp.tanh(ct)
    return ct, ht


if __name__ == "__main__":
    batch = 2
    in_channels = 4
    out_channels = 32

    key = jax.random.PRNGKey(0)
    keys = jax.random.split(key, 8)

    # Parameters (deterministic, xavier-uniform like MDLSTMCell.initialize_weights).
    w = _xavier_uniform(keys[0], (in_channels, out_channels * 5))
    u0 = _xavier_uniform(keys[1], (out_channels, out_channels * 5))
    u1 = _xavier_uniform(keys[2], (out_channels, out_channels * 5))
    b = jnp.zeros((out_channels * 5,), jnp.float32)

    # Inputs.
    x = jax.random.normal(keys[3], (batch, in_channels), jnp.float32)
    c_prev_dim0 = jax.random.normal(keys[4], (batch, out_channels), jnp.float32)
    h_prev_dim0 = jax.random.normal(keys[5], (batch, out_channels), jnp.float32)
    c_prev_dim1 = jax.random.normal(keys[6], (batch, out_channels), jnp.float32)
    h_prev_dim1 = jax.random.normal(keys[7], (batch, out_channels), jnp.float32)

    ct, ht = mdlstm_cell_forward(
        x, c_prev_dim0, h_prev_dim0, c_prev_dim1, h_prev_dim1, w, u0, u1, b)
    jax.block_until_ready((ct, ht))

    ct_ref, ht_ref = _reference(
        x, c_prev_dim0, h_prev_dim0, c_prev_dim1, h_prev_dim1, w, u0, u1, b)
    assert ct.shape == ct_ref.shape and ht.shape == ht_ref.shape
    assert jnp.allclose(ct, ct_ref, atol=2e-5, rtol=2e-5), (
        float(jnp.max(jnp.abs(ct - ct_ref))))
    assert jnp.allclose(ht, ht_ref, atol=2e-5, rtol=2e-5), (
        float(jnp.max(jnp.abs(ht - ht_ref))))

    print("KERNEL_OK")
</pallas_src>

<mosaic_0001>
module attributes {stable_mosaic.version = 11 : i64} {
  func.func @_mdlstm_kernel(%arg0: i32, %arg1: memref<8x69xf32, #tpu.memory_space<vmem>>, %arg2: memref<69x640xf32, #tpu.memory_space<vmem>>, %arg3: memref<8x128xf32, #tpu.memory_space<vmem>>, %arg4: memref<8x128xf32, #tpu.memory_space<vmem>>, %arg5: memref<8x128xf32, #tpu.memory_space<vmem>>, %arg6: memref<8x128xf32, #tpu.memory_space<vmem>>) attributes {dimension_semantics = [#tpu.dimension_semantics<parallel>], iteration_bounds = array<i64: 1>, scalar_prefetch = 0 : i64, scratch_operands = 0 : i64, tpu.core_type = #tpu.core_type<tc>, window_params = [{transform_indices = @transform_0, window_bounds = array<i64: 8, 69>}, {pipeline_mode = #tpu.pipeline_mode<synchronous>, transform_indices = @transform_1, window_bounds = array<i64: 69, 640>}, {transform_indices = @transform_2, window_bounds = array<i64: 8, 128>}, {transform_indices = @transform_3, window_bounds = array<i64: 8, 128>}, {transform_indices = @transform_4, window_bounds = array<i64: 8, 128>}, {transform_indices = @transform_5, window_bounds = array<i64: 8, 128>}]} {
    %c0 = arith.constant 0 : index
    %c0_0 = arith.constant 0 : index
    %0 = vector.load %arg1[%c0, %c0_0] : memref<8x69xf32, #tpu.memory_space<vmem>>, vector<8x69xf32>
    %c0_1 = arith.constant 0 : index
    %c0_2 = arith.constant 0 : index
    %1 = vector.load %arg2[%c0_1, %c0_2] : memref<69x640xf32, #tpu.memory_space<vmem>>, vector<69x640xf32>
    %cst = arith.constant dense<0.000000e+00> : vector<8x640xf32>
    %2 = tpu.matmul %0, %1, %cst {dimension_numbers = #tpu.dot_dimension_numbers<[1], [0], [0], [1], [0, 0, 1, 1], [], []>} : vector<8x69xf32>, vector<69x640xf32>, vector<8x640xf32> -> vector<8x640xf32>
    %3 = vector.extract_strided_slice %2 {offsets = [0, 0], sizes = [8, 128], strides = [1, 1]} : vector<8x640xf32> to vector<8x128xf32>
    %cst_3 = arith.constant 5.000000e-01 : f32
    %4 = vector.broadcast %cst_3 : f32 to vector<8x128xf32>
    %5 = arith.mulf %4, %3 : vector<8x128xf32>
    %6 = math.tanh %5 : vector<8x128xf32>
    %cst_4 = arith.constant 1.000000e+00 : f32
    %7 = vector.broadcast %cst_4 : f32 to vector<8x128xf32>
    %8 = arith.addf %6, %7 : vector<8x128xf32>
    %cst_5 = arith.constant 5.000000e-01 : f32
    %9 = vector.broadcast %cst_5 : f32 to vector<8x128xf32>
    %10 = arith.mulf %9, %8 : vector<8x128xf32>
    %11 = vector.extract_strided_slice %2 {offsets = [0, 128], sizes = [8, 128], strides = [1, 1]} : vector<8x640xf32> to vector<8x128xf32>
    %cst_6 = arith.constant 5.000000e-01 : f32
    %12 = vector.broadcast %cst_6 : f32 to vector<8x128xf32>
    %13 = arith.mulf %12, %11 : vector<8x128xf32>
    %14 = math.tanh %13 : vector<8x128xf32>
    %cst_7 = arith.constant 1.000000e+00 : f32
    %15 = vector.broadcast %cst_7 : f32 to vector<8x128xf32>
    %16 = arith.addf %14, %15 : vector<8x128xf32>
    %cst_8 = arith.constant 5.000000e-01 : f32
    %17 = vector.broadcast %cst_8 : f32 to vector<8x128xf32>
    %18 = arith.mulf %17, %16 : vector<8x128xf32>
    %19 = vector.extract_strided_slice %2 {offsets = [0, 256], sizes = [8, 128], strides = [1, 1]} : vector<8x640xf32> to vector<8x128xf32>
    %20 = math.tanh %19 : vector<8x128xf32>
    %21 = vector.extract_strided_slice %2 {offsets = [0, 384], sizes = [8, 128], strides = [1, 1]} : vector<8x640xf32> to vector<8x128xf32>
    %cst_9 = arith.constant 5.000000e-01 : f32
    %22 = vector.broadcast %cst_9 : f32 to vector<8x128xf32>
    %23 = arith.mulf %22, %21 : vector<8x128xf32>
    %24 = math.tanh %23 : vector<8x128xf32>
    %cst_10 = arith.constant 1.000000e+00 : f32
    %25 = vector.broadcast %cst_10 : f32 to vector<8x128xf32>
    %26 = arith.addf %24, %25 : vector<8x128xf32>
    %cst_11 = arith.constant 5.000000e-01 : f32
    %27 = vector.broadcast %cst_11 : f32 to vector<8x128xf32>
    %28 = arith.mulf %27, %26 : vector<8x128xf32>
    %29 = vector.extract_strided_slice %2 {offsets = [0, 512], sizes = [8, 128], strides = [1, 1]} : vector<8x640xf32> to vector<8x128xf32>
    %cst_12 = arith.constant 5.000000e-01 : f32
    %30 = vector.broadcast %cst_12 : f32 to vector<8x128xf32>
    %31 = arith.mulf %30, %29 : vector<8x128xf32>
    %32 = math.tanh %31 : vector<8x128xf32>
    %cst_13 = arith.constant 1.000000e+00 : f32
    %33 = vector.broadcast %cst_13 : f32 to vector<8x128xf32>
    %34 = arith.addf %32, %33 : vector<8x128xf32>
    %cst_14 = arith.constant 5.000000e-01 : f32
    %35 = vector.broadcast %cst_14 : f32 to vector<8x128xf32>
    %36 = arith.mulf %35, %34 : vector<8x128xf32>
    %c0_15 = arith.constant 0 : index
    %c0_16 = arith.constant 0 : index
    %37 = vector.load %arg3[%c0_15, %c0_16] : memref<8x128xf32, #tpu.memory_space<vmem>>, vector<8x128xf32>
    %c0_17 = arith.constant 0 : index
    %c0_18 = arith.constant 0 : index
    %38 = vector.load %arg4[%c0_17, %c0_18] : memref<8x128xf32, #tpu.memory_space<vmem>>, vector<8x128xf32>
    %39 = arith.mulf %36, %37 : vector<8x128xf32>
    %cst_19 = arith.constant 1.000000e+00 : f32
    %40 = vector.broadcast %cst_19 : f32 to vector<8x128xf32>
    %41 = arith.subf %40, %36 : vector<8x128xf32>
    %42 = arith.mulf %41, %38 : vector<8x128xf32>
    %43 = arith.addf %39, %42 : vector<8x128xf32>
    %44 = arith.mulf %18, %43 : vector<8x128xf32>
    %45 = arith.mulf %10, %20 : vector<8x128xf32>
    %46 = arith.addf %44, %45 : vector<8x128xf32>
    %47 = math.tanh %46 : vector<8x128xf32>
    %48 = arith.mulf %28, %47 : vector<8x128xf32>
    %c0_20 = arith.constant 0 : index
    %c0_21 = arith.constant 0 : index
    %49 = vector.load %arg5[%c0_20, %c0_21] : memref<8x128xf32, #tpu.memory_space<vmem>>, vector<8x128xf32>
    tpu.vector_store %arg5[%c0_20, %c0_21], %46 {strides = array<i32>} : memref<8x128xf32, #tpu.memory_space<vmem>>, vector<8x128xf32>,
    %c0_22 = arith.constant 0 : index
    %c0_23 = arith.constant 0 : index
    %50 = vector.load %arg6[%c0_22, %c0_23] : memref<8x128xf32, #tpu.memory_space<vmem>>, vector<8x128xf32>
    tpu.vector_store %arg6[%c0_22, %c0_23], %48 {strides = array<i32>} : memref<8x128xf32, #tpu.memory_space<vmem>>, vector<8x128xf32>,
    return
  }
  func.func @transform_0(%arg0: i32) -> (i32, i32) {
    %c0_i32 = arith.constant 0 : i32
    %c0_i32_0 = arith.constant 0 : i32
    return %arg0, %c0_i32 : i32, i32
  }
  func.func @transform_1(%arg0: i32) -> (i32, i32) {
    %c0_i32 = arith.constant 0 : i32
    %c0_i32_0 = arith.constant 0 : i32
    %c0_i32_1 = arith.constant 0 : i32
    return %c0_i32, %c0_i32_0 : i32, i32
  }
  func.func @transform_2(%arg0: i32) -> (i32, i32) {
    %c0_i32 = arith.constant 0 : i32
    %c0_i32_0 = arith.constant 0 : i32
    return %arg0, %c0_i32 : i32, i32
  }
  func.func @transform_3(%arg0: i32) -> (i32, i32) {
    %c0_i32 = arith.constant 0 : i32
    %c0_i32_0 = arith.constant 0 : i32
    return %arg0, %c0_i32 : i32, i32
  }
  func.func @transform_4(%arg0: i32) -> (i32, i32) {
    %c0_i32 = arith.constant 0 : i32
    %c0_i32_0 = arith.constant 0 : i32
    return %arg0, %c0_i32 : i32, i32
  }
  func.func @transform_5(%arg0: i32) -> (i32, i32) {
    %c0_i32 = arith.constant 0 : i32
    %c0_i32_0 = arith.constant 0 : i32
    return %arg0, %c0_i32 : i32, i32
  }
}

</mosaic_0001>

<llo_original>
// kernel: tpu_custom_call.1
$region0: #{tpu_custom_call.1}
  #allocation0 [shape = 'u32[]', space=smem, size = 0x4, offset = 0x4, fixed_abs, tag = 'smem constant byte address 0x4 - core index']
  #allocation1 [shape = 'u32[72,128]{1,0:T(1,128)}', space=vmem, size = 0x9000, scoped, tag = 'internal scratch']
  %s0 = inlined_call_operand.hbm [shape: f32[8,69], index: 0, kind: input, shape index: {}]
  %s1 = inlined_call_operand.hbm [shape: f32[69,640], index: 1, kind: input, shape index: {}]
  %s2 = inlined_call_operand.hbm [shape: f32[8,128], index: 2, kind: input, shape index: {}]
  %s3 = inlined_call_operand.hbm [shape: f32[8,128], index: 3, kind: input, shape index: {}]
  %s4 = inlined_call_operand.hbm [shape: f32[8,128], index: 4, kind: output, shape index: {0}]
  %s5 = inlined_call_operand.hbm [shape: f32[8,128], index: 5, kind: output, shape index: {1}]
  %6 = xla_tuple %s4, %s5
  %s7 = sld [smem:[#allocation0]]
  $region50: #{tpu_custom_call.1} parent=0
    _
  %s9 = ssub.s32 1, %s7
  %s10 = scalar_select 0, %s9, %s7
  $region1: #{tpu_custom_call.1} parent=0
    #allocation2 [shape = 'u8[4096]{0}', space=vmem, size = 0x1000, scoped, tag = 'input window, operand 0, single buffered']
    #allocation3 [shape = 's32[1]{0}', space=sflag, size = 0x4, scoped, tag = 'scoped memory for tpu_custom_call.1']
    #allocation4 [shape = 's32[1]{0}', space=sflag, size = 0x4, scoped, tag = 'scoped memory for tpu_custom_call.1']
    #allocation5 [shape = 'u8[184320]{0}', space=vmem, size = 0x2d000, scoped, tag = 'input window, operand 1, single buffered']
    #allocation6 [shape = 's32[1]{0}', space=sflag, size = 0x4, scoped, tag = 'scoped memory for tpu_custom_call.1']
    #allocation7 [shape = 'u8[4096]{0}', space=vmem, size = 0x1000, scoped, tag = 'input window, operand 2, single buffered']
    #allocation8 [shape = 'u8[4096]{0}', space=vmem, size = 0x1000, scoped, tag = 'input window, operand 3, single buffered']
    #allocation9 [shape = 's32[1]{0}', space=sflag, size = 0x4, scoped, tag = 'scoped memory for tpu_custom_call.1']
    #allocation10 [shape = 'u8[4096]{0}', space=vmem, size = 0x1000, scoped, tag = 'output window, operand 0, single buffered']
    #allocation11 [shape = 'u8[4096]{0}', space=vmem, size = 0x1000, scoped, tag = 'output window, operand 1, single buffered']
    #allocation12 [shape = 's32[1]{0}', space=sflag, size = 0x4, scoped, tag = 'scoped memory for tpu_custom_call.1']
    %11 = vsyncpa [#allocation3], 0
    %12 = vsyncpa [#allocation6], 0
    %13 = vsyncpa [#allocation9], 0
    %14 = vsyncpa [#allocation4], 0
    %15 = vsyncpa [#allocation12], 0
    // Predicated region
    $region2: #{tpu_custom_call.1} parent=1 // pred_check
      _
    $region3: #{tpu_custom_call.1} parent=1 // pred_check_branch
      %17 = sbr.rel (0) target = $region5
    $region4: #{tpu_custom_call.1} parent=1 // pred_region
      %19 = vsyncadd [#allocation3], 0
      %s21 = sshll.u32 %s0, 4
      %s22 = int_to_ptr.hbm [resolvable:$true] %s21
      %s23 = sshll.u32 [#allocation2], 4
      %s24 = int_to_ptr.vmem [resolvable:$true] %s23
      %26 = dma.hbm_to_vmem [thread:$0]  %s22, 128, %s24, [#allocation3]
    $region5: #{tpu_custom_call.1} parent=1 // pred_fallthru
      _
    // Predicated region
    $region6: #{tpu_custom_call.1} parent=1 // pred_check
      _
    $region7: #{tpu_custom_call.1} parent=1 // pred_check_branch
      %28 = sbr.rel (0) target = $region9
    $region8: #{tpu_custom_call.1} parent=1 // pred_region
      %30 = vsyncadd [#allocation6], 0
      %s31 = sshll.u32 %s1, 4
      %s32 = int_to_ptr.hbm [resolvable:$true] %s31
      %s33 = sshll.u32 [#allocation5], 4
      %s34 = int_to_ptr.vmem [resolvable:$true] %s33
      %39 = dma.hbm_to_vmem [thread:$0]  %s32, 5760, %s34, [#allocation6], 640, 640, 40
    $region9: #{tpu_custom_call.1} parent=1 // pred_fallthru
      _
    // Predicated region
    $region10: #{tpu_custom_call.1} parent=1 // pred_check
      _
    $region11: #{tpu_custom_call.1} parent=1 // pred_check_branch
      %41 = sbr.rel (0) target = $region13
    $region12: #{tpu_custom_call.1} parent=1 // pred_region
      %43 = vsyncadd [#allocation6], 0
      %s45 = sshll.u32 %s2, 4
      %s46 = int_to_ptr.hbm [resolvable:$true] %s45
      %s47 = sshll.u32 [#allocation7], 4
      %s48 = int_to_ptr.vmem [resolvable:$true] %s47
      %50 = dma.hbm_to_vmem [thread:$0]  %s46, 128, %s48, [#allocation6]
    $region13: #{tpu_custom_call.1} parent=1 // pred_fallthru
      _
    // Predicated region
    $region14: #{tpu_custom_call.1} parent=1 // pred_check
      _
    $region15: #{tpu_custom_call.1} parent=1 // pred_check_branch
      %52 = sbr.rel (0) target = $region17
    $region16: #{tpu_custom_call.1} parent=1 // pred_region
      %54 = vsyncadd [#allocation9], 0
      %s56 = sshll.u32 %s3, 4
      %s57 = int_to_ptr.hbm [resolvable:$true] %s56
      %s58 = sshll.u32 [#allocation8], 4
      %s59 = int_to_ptr.vmem [resolvable:$true] %s58
      %61 = dma.hbm_to_vmem [thread:$0]  %s57, 128, %s59, [#allocation9]
    $region17: #{tpu_custom_call.1} parent=1 // pred_fallthru
      _
    // Predicated region
    $region18: #{tpu_custom_call.1} parent=1 // pred_check
      _
    $region19: #{tpu_custom_call.1} parent=1 // pred_check_branch
      %63 = sbr.rel (0) target = $region21
    $region20: #{tpu_custom_call.1} parent=1 // pred_region
      %65 = dma.done [#allocation3], 128
    $region21: #{tpu_custom_call.1} parent=1 // pred_fallthru
      _
    // Predicated region
    $region22: #{tpu_custom_call.1} parent=1 // pred_check
      _
    $region23: #{tpu_custom_call.1} parent=1 // pred_check_branch
      %67 = sbr.rel (0) target = $region25
    $region24: #{tpu_custom_call.1} parent=1 // pred_region
      %69 = dma.done [#allocation6], 5760
    $region25: #{tpu_custom_call.1} parent=1 // pred_fallthru
      _
    // Predicated region
    $region26: #{tpu_custom_call.1} parent=1 // pred_check
      _
    $region27: #{tpu_custom_call.1} parent=1 // pred_check_branch
      %71 = sbr.rel (0) target = $region29
    $region28: #{tpu_custom_call.1} parent=1 // pred_region
      %73 = dma.done [#allocation6], 128
    $region29: #{tpu_custom_call.1} parent=1 // pred_fallthru
      _
    // Predicated region
    $region30: #{tpu_custom_call.1} parent=1 // pred_check
      _
    $region31: #{tpu_custom_call.1} parent=1 // pred_check_branch
      %75 = sbr.rel (0) target = $region33
    $region32: #{tpu_custom_call.1} parent=1 // pred_region
      %77 = dma.done [#allocation9], 128
    $region33: #{tpu_custom_call.1} parent=1 // pred_fallthru
      _
    %v78 = vld [vmem:[#allocation2] sm:$0xff]
    %v79 = vld [vmem:[#allocation5] sm:$0xff]
    %v80 = vld [vmem:[#allocation5 + $0x8] sm:$0xff]
    %v81 = vld [vmem:[#allocation5 + $0x10] sm:$0xff]
    %v82 = vld [vmem:[#allocation5 + $0x18] sm:$0xff]
    %v83 = vld [vmem:[#allocation5 + $0x20] sm:$0xff]
    %v84 = vld [vmem:[#allocation5 + $0x28] sm:$0xff]
    %v85 = vld [vmem:[#allocation5 + $0x30] sm:$0xff]
    %v86 = vld [vmem:[#allocation5 + $0x38] sm:$0xff]
    %v87 = vld [vmem:[#allocation5 + $0x40] sm:$0xff]
    %v88 = vld [vmem:[#allocation5 + $0x48] sm:$0xff]
    %v89 = vld [vmem:[#allocation5 + $0x50] sm:$0xff]
    %v90 = vld [vmem:[#allocation5 + $0x58] sm:$0xff]
    %v91 = vld [vmem:[#allocation5 + $0x60] sm:$0xff]
    %v92 = vld [vmem:[#allocation5 + $0x68] sm:$0xff]
    %v93 = vld [vmem:[#allocation5 + $0x70] sm:$0xff]
    %v94 = vld [vmem:[#allocation5 + $0x78] sm:$0xff]
    %v95 = vld [vmem:[#allocation5 + $0x80] sm:$0xff]
    %v96 = vld [vmem:[#allocation5 + $0x88] sm:$0xff]
    %v97 = vld [vmem:[#allocation5 + $0x90] sm:$0xff]
    %v98 = vld [vmem:[#allocation5 + $0x98] sm:$0xff]
    %v99 = vld [vmem:[#allocation5 + $0xa0] sm:$0xff]
    %v100 = vld [vmem:[#allocation5 + $0xa8] sm:$0xff]
    %v101 = vld [vmem:[#allocation5 + $0xb0] sm:$0xff]
    %v102 = vld [vmem:[#allocation5 + $0xb8] sm:$0xff]
    %v103 = vld [vmem:[#allocation5 + $0xc0] sm:$0xff]
    %v104 = vld [vmem:[#allocation5 + $0xc8] sm:$0xff]
    %v105 = vld [vmem:[#allocation5 + $0xd0] sm:$0xff]
    %v106 = vld [vmem:[#allocation5 + $0xd8] sm:$0xff]
    %v107 = vld [vmem:[#allocation5 + $0xe0] sm:$0xff]
    %v108 = vld [vmem:[#allocation5 + $0xe8] sm:$0xff]
    %v109 = vld [vmem:[#allocation5 + $0xf0] sm:$0xff]
    %v110 = vld [vmem:[#allocation5 + $0xf8] sm:$0xff]
    %v111 = vld [vmem:[#allocation5 + $0x100] sm:$0xff]
    %v112 = vld [vmem:[#allocation5 + $0x108] sm:$0xff]
    %v113 = vld [vmem:[#allocation5 + $0x110] sm:$0xff]
    %v114 = vld [vmem:[#allocation5 + $0x118] sm:$0xff]
    %v115 = vld [vmem:[#allocation5 + $0x120] sm:$0xff]
    %v116 = vld [vmem:[#allocation5 + $0x128] sm:$0xff]
    %v117 = vld [vmem:[#allocation5 + $0x130] sm:$0xff]
    %v118 = vld [vmem:[#allocation5 + $0x138] sm:$0xff]
    %v119 = vld [vmem:[#allocation5 + $0x140] sm:$0x1f]
    %v120 = vld [vmem:[#allocation5 + $0x148] sm:$0x1f]
    %v121 = vld [vmem:[#allocation5 + $0x150] sm:$0x1f]
    %v122 = vld [vmem:[#allocation5 + $0x158] sm:$0x1f]
    %v123 = vld [vmem:[#allocation5 + $0x160] sm:$0x1f]
    %vm124 = vcmask 564224
    %v126 = vsel %vm124, %v78, 0
    %vm128 = vcmask 1044480
    %v130 = vsel %vm128, %v119, 0
    %v133 = vsel %vm128, %v120, 0
    %v136 = vsel %vm128, %v121, 0
    %v139 = vsel %vm128, %v122, 0
    %v142 = vsel %vm128, %v123, 0
    %144 = vmatpush.msra.mxu0 0.0
    %145 = vmatpush.msra.mxu0 0.0
    %146 = vmatpush.msra.mxu0 0.0
    %147 = vmatpush.msra.mxu0 0.0
    %148 = vmatpush.msra.mxu0 0.0
    %149 = vmatpush.msra.mxu0 0.0
    %150 = vmatpush.msra.mxu0 0.0
    %151 = vmatpush.msra.mxu0 %v130
    %152 = vmatpush.msra.mxu0 %v114
    %153 = vmatpush.msra.mxu0 %v109
    %154 = vmatpush.msra.mxu0 %v104
    %155 = vmatpush.msra.mxu0 %v99
    %156 = vmatpush.msra.mxu0 %v94
    %157 = vmatpush.msra.mxu0 %v89
    %158 = vmatpush.msra.mxu0 %v84
    %159 = vmatpush.msra.mxu0 %v79
    %160 = vmatmul.f32.gmra.mxu0 %v126
    %v161 = vpop.f32.mrf.mxu0
    %v162 = vadd.f32 0.0, %v161
    %163 = vdwg.mxu0
    %164 = vmatpush.msra.mxu0 0.0
    %165 = vmatpush.msra.mxu0 0.0
    %166 = vmatpush.msra.mxu0 0.0
    %167 = vmatpush.msra.mxu0 0.0
    %168 = vmatpush.msra.mxu0 0.0
    %169 = vmatpush.msra.mxu0 0.0
    %170 = vmatpush.msra.mxu0 0.0
    %171 = vmatpush.msra.mxu0 %v133
    %172 = vmatpush.msra.mxu0 %v115
    %173 = vmatpush.msra.mxu0 %v110
    %174 = vmatpush.msra.mxu0 %v105
    %175 = vmatpush.msra.mxu0 %v100
    %176 = vmatpush.msra.mxu0 %v95
    %177 = vmatpush.msra.mxu0 %v90
    %178 = vmatpush.msra.mxu0 %v85
    %179 = vmatpush.msra.mxu0 %v80
    %180 = vmatmul.f32.gmra.mxu0 %v126
    %v181 = vpop.f32.mrf.mxu0
    %v182 = vadd.f32 0.0, %v181
    %183 = vdwg.mxu0
    %184 = vmatpush.msra.mxu0 0.0
    %185 = vmatpush.msra.mxu0 0.0
    %186 = vmatpush.msra.mxu0 0.0
    %187 = vmatpush.msra.mxu0 0.0
    %188 = vmatpush.msra.mxu0 0.0
    %189 = vmatpush.msra.mxu0 0.0
    %190 = vmatpush.msra.mxu0 0.0
    %191 = vmatpush.msra.mxu0 %v136
    %192 = vmatpush.msra.mxu0 %v116
    %193 = vmatpush.msra.mxu0 %v111
    %194 = vmatpush.msra.mxu0 %v106
    %195 = vmatpush.msra.mxu0 %v101
    %196 = vmatpush.msra.mxu0 %v96
    %197 = vmatpush.msra.mxu0 %v91
    %198 = vmatpush.msra.mxu0 %v86
    %199 = vmatpush.msra.mxu0 %v81
    %200 = vmatmul.f32.gmra.mxu0 %v126
    %v201 = vpop.f32.mrf.mxu0
    %v202 = vadd.f32 0.0, %v201
    %203 = vdwg.mxu0
    %204 = vmatpush.msra.mxu0 0.0
    %205 = vmatpush.msra.mxu0 0.0
    %206 = vmatpush.msra.mxu0 0.0
    %207 = vmatpush.msra.mxu0 0.0
    %208 = vmatpush.msra.mxu0 0.0
    %209 = vmatpush.msra.mxu0 0.0
    %210 = vmatpush.msra.mxu0 0.0
    %211 = vmatpush.msra.mxu0 %v139
    %212 = vmatpush.msra.mxu0 %v117
    %213 = vmatpush.msra.mxu0 %v112
    %214 = vmatpush.msra.mxu0 %v107
    %215 = vmatpush.msra.mxu0 %v102
    %216 = vmatpush.msra.mxu0 %v97
    %217 = vmatpush.msra.mxu0 %v92
    %218 = vmatpush.msra.mxu0 %v87
    %219 = vmatpush.msra.mxu0 %v82
    %220 = vmatmul.f32.gmra.mxu0 %v126
    %v221 = vpop.f32.mrf.mxu0
    %v222 = vadd.f32 0.0, %v221
    %223 = vdwg.mxu0
    %224 = vmatpush.msra.mxu0 0.0
    %225 = vmatpush.msra.mxu0 0.0
    %226 = vmatpush.msra.mxu0 0.0
    %227 = vmatpush.msra.mxu0 0.0
    %228 = vmatpush.msra.mxu0 0.0
    %229 = vmatpush.msra.mxu0 0.0
    %230 = vmatpush.msra.mxu0 0.0
    %231 = vmatpush.msra.mxu0 %v142
    %232 = vmatpush.msra.mxu0 %v118
    %233 = vmatpush.msra.mxu0 %v113
    %234 = vmatpush.msra.mxu0 %v108
    %235 = vmatpush.msra.mxu0 %v103
    %236 = vmatpush.msra.mxu0 %v98
    %237 = vmatpush.msra.mxu0 %v93
    %238 = vmatpush.msra.mxu0 %v88
    %239 = vmatpush.msra.mxu0 %v83
    %240 = vmatmul.f32.gmra.mxu0 %v126
    %v241 = vpop.f32.mrf.mxu0
    %v242 = vadd.f32 0.0, %v241
    %243 = vdwg.mxu0
    %v244 = vmul.f32 %v162, 0.5
    %v245 = vtanh.pop %v244
    %v246 = vadd.f32 %v245, 1.0
    %v247 = vmul.f32 %v246, 0.5
    %v248 = vmul.f32 %v182, 0.5
    %v249 = vtanh.pop %v248
    %v250 = vadd.f32 %v249, 1.0
    %v251 = vmul.f32 %v250, 0.5
    %v252 = vtanh.pop %v202
    %v253 = vmul.f32 %v222, 0.5
    %v254 = vtanh.pop %v253
    %v255 = vadd.f32 %v254, 1.0
    %v256 = vmul.f32 %v255, 0.5
    %v257 = vmul.f32 %v242, 0.5
    %v258 = vtanh.pop %v257
    %v259 = vadd.f32 %v258, 1.0
    %v260 = vmul.f32 %v259, 0.5
    %v261 = vld [vmem:[#allocation7] sm:$0xff]
    %v262 = vld [vmem:[#allocation8] sm:$0xff]
    %v263 = vmul.f32 %v260, %v261
    %v264 = vsub.f32 1.0, %v260
    %v265 = vmul.f32 %v264, %v262
    %v266 = vadd.f32 %v263, %v265
    %v267 = vmul.f32 %v251, %v266
    %v268 = vmul.f32 %v247, %v252
    %v269 = vadd.f32 %v267, %v268
    %v270 = vtanh.pop %v269
    %v271 = vmul.f32 %v256, %v270
    %272 = vst [vmem:[#allocation10] sm:$0xff] %v269
    %273 = vst [vmem:[#allocation11] sm:$0xff] %v271
    // Predicated region
    $region34: #{tpu_custom_call.1} parent=1 // pred_check
      _
    $region35: #{tpu_custom_call.1} parent=1 // pred_check_branch
      %275 = sbr.rel (0) target = $region37
    $region36: #{tpu_custom_call.1} parent=1 // pred_region
      %277 = vsyncadd [#allocation4], 0
      %s279 = sshll.u32 [#allocation10], 4
      %s280 = int_to_ptr.vmem [resolvable:$true] %s279
      %s281 = sshll.u32 %s4, 4
      %s282 = int_to_ptr.hbm [resolvable:$true] %s281
      %284 = dma.vmem_to_hbm [thread:$0]  %s280, 128, %s282, [#allocation4]
    $region37: #{tpu_custom_call.1} parent=1 // pred_fallthru
      _
    // Predicated region
    $region38: #{tpu_custom_call.1} parent=1 // pred_check
      _
    $region39: #{tpu_custom_call.1} parent=1 // pred_check_branch
      %286 = sbr.rel (0) target = $region41
    $region40: #{tpu_custom_call.1} parent=1 // pred_region
      %288 = vsyncadd [#allocation12], 0
      %s290 = sshll.u32 [#allocation11], 4
      %s291 = int_to_ptr.vmem [resolvable:$true] %s290
      %s292 = sshll.u32 %s5, 4
      %s293 = int_to_ptr.hbm [resolvable:$true] %s292
      %295 = dma.vmem_to_hbm [thread:$0]  %s291, 128, %s293, [#allocation12]
    $region41: #{tpu_custom_call.1} parent=1 // pred_fallthru
      _
    // Predicated region
    $region42: #{tpu_custom_call.1} parent=1 // pred_check
      _
    $region43: #{tpu_custom_call.1} parent=1 // pred_check_branch
      %297 = sbr.rel (0) target = $region45
    $region44: #{tpu_custom_call.1} parent=1 // pred_region
      %299 = dma.done [#allocation4], 128
    $region45: #{tpu_custom_call.1} parent=1 // pred_fallthru
      _
    // Predicated region
    $region46: #{tpu_custom_call.1} parent=1 // pred_check
      _
    $region47: #{tpu_custom_call.1} parent=1 // pred_check_branch
      %301 = sbr.rel (0) target = $region49
    $region48: #{tpu_custom_call.1} parent=1 // pred_region
      %303 = dma.done [#allocation12], 128
    $region49: #{tpu_custom_call.1} parent=1 // pred_fallthru
      _
    %304 = vsyncpa [#allocation3], 1
    %305 = vsyncpa [#allocation6], 1
    %306 = vsyncpa [#allocation9], 1
    %307 = vsyncpa [#allocation4], 1
    %308 = vsyncpa [#allocation12], 1

</llo_original>
